<compile_context>
chip_gen: v7x
topology: tpu7x:2x2x1
jax: 0.10.0
libtpu: 0.0.40
codegen_flags: <defaults>
</compile_context>

<pallas_src>
import jax
import jax.numpy as jnp
from jax.experimental import pallas as pl
from jax.experimental.pallas import tpu as pltpu


def _tree_min(parts):
    """Pairwise (tree) minimum of a list of equal-shaped arrays."""
    while len(parts) > 1:
        nxt = []
        for i in range(0, len(parts) - 1, 2):
            nxt.append(jnp.minimum(parts[i], parts[i + 1]))
        if len(parts) % 2:
            nxt.append(parts[-1])
        parts = nxt
    return parts[0]


def _hausdorff_kernel(xT_ref, yT_ref, out_ref, rowmin_ref, colmin_ref, v1_ref):
    ni = pl.program_id(1)
    mi = pl.program_id(2)
    last_ni = pl.num_programs(1) - 1
    last_mi = pl.num_programs(2) - 1

    d, tn = xT_ref.shape          # (D, tn): features on sublanes, points on lanes
    tm = yT_ref.shape[1]
    n_chunks = tm // 128          # tm is always a multiple of 128

    # ---- per-batch / per-row-tile accumulator resets ------------------------
    @pl.when((ni == 0) & (mi == 0))
    def _():
        colmin_ref[...] = jnp.full(colmin_ref.shape, jnp.inf, jnp.float32)
        v1_ref[0] = jnp.float32(0.0)          # squared distances are >= 0

    @pl.when(mi == 0)
    def _():
        rowmin_ref[...] = jnp.full(rowmin_ref.shape, jnp.inf, jnp.float32)

    # ---- x tile and ||x||^2, already broadcast to chunk shape ---------------
    xT = xT_ref[...]                                            # (D, tn)
    # ones-dot with N=128 lands ||x||^2 directly in (tn, 128) layout: no
    # (tn, 1) column, no XLU transpose, no per-chunk broadcast work.
    x2_b = jax.lax.dot_general(
        xT * xT, jnp.ones((d, 128), jnp.float32),
        dimension_numbers=(((0,), (0,)), ((), ())),
        preferred_element_type=jnp.float32)                     # (tn, 128)

    rm = rowmin_ref[...]                                        # (tn, 128)

    # ---- fused chunk loop: produce 128 columns of sq, consume immediately ---
    for c in range(n_chunks):
        y_c = yT_ref[:, c * 128:(c + 1) * 128]                  # (D, 128)
        y2_c = jnp.sum(y_c * y_c, axis=0, keepdims=True)        # (1, 128)
        xy = jax.lax.dot_general(
            xT, y_c,
            dimension_numbers=(((0,), (0,)), ((), ())),
            preferred_element_type=jnp.float32)                 # (tn, 128)
        sq = jnp.maximum(x2_b + y2_c - 2.0 * xy, 0.0)           # squared dists

        # row direction: running min over all y columns (pure VPU).
        rm = jnp.minimum(rm, sq)

        # column direction: tree-min over 8-row groups, then a single 128-lane
        # slice update of the persistent col-min scratch.
        cpart = _tree_min([sq[r * 8:(r + 1) * 8, :] for r in range(tn // 8)])
        off = pl.multiple_of(mi * tm + c * 128, 128)
        cur = colmin_ref[:, pl.ds(off, 128)]
        colmin_ref[:, pl.ds(off, 128)] = jnp.minimum(cur, cpart)

    rowmin_ref[...] = rm

    # ---- finalize the row direction once per N-tile (one XLU pass) ----------
    @pl.when(mi == last_mi)
    def _():
        tile_v1 = jnp.max(jnp.min(rm, axis=1, keepdims=True))   # scalar
        v1_ref[0] = jnp.maximum(v1_ref[0], tile_v1)

    # ---- finalize the batch: one sqrt, on the lane-dense output splat -------
    @pl.when((ni == last_ni) & (mi == last_mi))
    def _():
        v2 = jnp.max(jnp.min(colmin_ref[...], axis=0, keepdims=True))
        hd_sq = jnp.maximum(v1_ref[0], v2)
        out_ref[...] = jnp.sqrt(jnp.full(out_ref.shape, hd_sq, jnp.float32))


def _round_up(v, m):
    return ((v + m - 1) // m) * m


def hausdorff_loss(x, y, *, tn_cap=256, tm_cap=1024):
    """Pallas TPU implementation of HausdorffLoss.forward (p=2).

    x: (B, N, D), y: (B, M, D).  Tile caps must be multiples of 128.
    Defaults suit v6e/v7x; on v5e prefer tn_cap=128 (single vector-store slot
    makes spilling the running row-min disproportionately expensive).
    Note: the col-min scratch is 32 * round_up(M, tm) bytes — for M in the
    ~10^6 range on v7x, swap which point set is x vs. y (Hausdorff is
    symmetric) so the persistent scratch tracks the smaller set.
    """
    B, N, D = x.shape
    B2, M, D2 = y.shape
    assert B == B2 and D == D2, "batch / feature dims must match"
    assert tn_cap % 128 == 0 and tm_cap % 128 == 0

    # Module semantics: torch.cdist on .float() inputs.
    x = x.astype(jnp.float32)
    y = y.astype(jnp.float32)

    # Hausdorff distance is translation invariant: center both sets with a
    # shared per-batch offset to tame cancellation in ||x||^2+||y||^2-2*x.y.
    mu = (jnp.sum(x, axis=1, keepdims=True)
          + jnp.sum(y, axis=1, keepdims=True)) / float(N + M)
    x = x - mu
    y = y - mu

    # Lane-dense feature-major layout (B, D, points).  The point axis (lanes)
    # is padded to a multiple of the tile with EDGE replication: duplicate
    # points leave the Hausdorff distance unchanged, so the kernel needs no
    # tail masking.  The pad rides on the transpose copy this layout change
    # requires anyway.
    tn = min(tn_cap, _round_up(N, 128))
    tm = min(tm_cap, _round_up(M, 128))
    n_pad = _round_up(N, tn)
    m_pad = _round_up(M, tm)

    xT = jnp.transpose(x, (0, 2, 1))                  # (B, D, N)
    yT = jnp.transpose(y, (0, 2, 1))                  # (B, D, M)
    if n_pad != N:
        xT = jnp.pad(xT, ((0, 0), (0, 0), (0, n_pad - N)), mode="edge")
    if m_pad != M:
        yT = jnp.pad(yT, ((0, 0), (0, 0), (0, m_pad - M)), mode="edge")

    grid = (B, n_pad // tn, m_pad // tm)

    out = pl.pallas_call(
        _hausdorff_kernel,
        out_shape=jax.ShapeDtypeStruct((B, 8, 128), jnp.float32),
        grid_spec=pltpu.PrefetchScalarGridSpec(
            num_scalar_prefetch=0,
            grid=grid,
            in_specs=[
                pl.BlockSpec((None, D, tn), lambda b, ni, mi: (b, 0, ni)),
                pl.BlockSpec((None, D, tm), lambda b, ni, mi: (b, 0, mi)),
            ],
            out_specs=pl.BlockSpec((None, 8, 128), lambda b, ni, mi: (b, 0, 0)),
            scratch_shapes=[
                pltpu.VMEM((tn, 128), jnp.float32),   # running row-min partial
                pltpu.VMEM((8, m_pad), jnp.float32),  # running col-min partial
                pltpu.SMEM((1,), jnp.float32),        # running v1 (squared)
            ],
        ),
        compiler_params=pltpu.CompilerParams(
            # batch axis parallel (megacore / 2 TCs on v7x); the tile axes carry
            # the scratch accumulators and must stay "arbitrary".
            dimension_semantics=("parallel", "arbitrary", "arbitrary"),
        ),
    )(xT, yT)

    return jnp.mean(out[:, 0, 0])


def _reference_loss(x, y):
    # Direct (non-matmul) reference matching torch.cdist(p=2) semantics exactly.
    x = x.astype(jnp.float32)
    y = y.astype(jnp.float32)
    diff = x[:, :, None, :] - y[:, None, :, :]            # (B, N, M, D)
    dist = jnp.sqrt(jnp.sum(diff * diff, axis=-1))        # (B, N, M)
    v1 = jnp.max(jnp.min(dist, axis=2), axis=1)           # (B,)
    v2 = jnp.max(jnp.min(dist, axis=1), axis=1)           # (B,)
    return jnp.mean(jnp.maximum(v1, v2))


if __name__ == "__main__":
    key = jax.random.PRNGKey(0)
    kx, ky, kx2, ky2 = jax.random.split(key, 4)

    loss_fn = jax.jit(hausdorff_loss)

    # Small case (single tile per batch); common +100 offset exercises the
    # cancellation mitigation (Hausdorff is translation invariant).
    B, N, M, D = 2, 8, 16, 32
    x = jax.random.normal(kx, (B, N, D), dtype=jnp.float32) + 100.0
    y = jax.random.normal(ky, (B, M, D), dtype=jnp.float32) + 100.0

    loss = jax.block_until_ready(loss_fn(x, y))
    ref = _reference_loss(x, y)
    assert jnp.allclose(loss, ref, rtol=1e-3, atol=1e-3), (loss, ref)

    # Multi-tile case: exercises N/M tiling, edge padding, chunked col-min
    # scratch updates and the cross-tile accumulators.
    B2_, N2_, M2_, D2_ = 2, 300, 600, 8
    x2 = jax.random.normal(kx2, (B2_, N2_, D2_), dtype=jnp.float32)
    y2 = jax.random.normal(ky2, (B2_, M2_, D2_), dtype=jnp.float32)

    loss2 = jax.block_until_ready(loss_fn(x2, y2))
    ref2 = _reference_loss(x2, y2)
    assert jnp.allclose(loss2, ref2, rtol=1e-3, atol=1e-3), (loss2, ref2)

    print("KERNEL_OK")
</pallas_src>

<mosaic_0001>
module attributes {stable_mosaic.version = 11 : i64} {
  func.func @_hausdorff_kernel(%arg0: i32, %arg1: i32, %arg2: i32, %arg3: memref<1x32x128xf32, #tpu.memory_space<vmem>>, %arg4: memref<1x32x128xf32, #tpu.memory_space<vmem>>, %arg5: memref<1x8x128xf32, #tpu.memory_space<vmem>>, %arg6: memref<128x128xf32, #tpu.memory_space<vmem>>, %arg7: memref<8x128xf32, #tpu.memory_space<vmem>>, %arg8: memref<1xf32, #tpu.memory_space<smem>>) attributes {dimension_semantics = [#tpu.dimension_semantics<parallel>, #tpu.dimension_semantics<arbitrary>, #tpu.dimension_semantics<arbitrary>], iteration_bounds = array<i64: 2, 1, 1>, scalar_prefetch = 0 : i64, scratch_operands = 3 : i64, tpu.core_type = #tpu.core_type<tc>, window_params = [{transform_indices = @transform_0, window_bounds = array<i64: 1, 32, 128>}, {transform_indices = @transform_1, window_bounds = array<i64: 1, 32, 128>}, {transform_indices = @transform_2, window_bounds = array<i64: 1, 8, 128>}]} {
    %c0_i32 = arith.constant 0 : i32
    %0 = arith.cmpi eq, %arg1, %c0_i32 : i32
    %c0_i32_0 = arith.constant 0 : i32
    %1 = arith.cmpi eq, %arg2, %c0_i32_0 : i32
    %2 = arith.andi %0, %1 : i1
    %3 = arith.extui %2 : i1 to i32
    %c0_i32_1 = arith.constant 0 : i32
    %4 = arith.cmpi ne, %3, %c0_i32_1 : i32
    scf.if %4 {
      %cst_26 = arith.constant 0x7F800000 : f32
      %76 = vector.broadcast %cst_26 : f32 to vector<8x128xf32>
      %c0_27 = arith.constant 0 : index
      %c0_28 = arith.constant 0 : index
      %77 = vector.load %arg7[%c0_27, %c0_28] : memref<8x128xf32, #tpu.memory_space<vmem>>, vector<8x128xf32>
      tpu.vector_store %arg7[%c0_27, %c0_28], %76 {strides = array<i32>} : memref<8x128xf32, #tpu.memory_space<vmem>>, vector<8x128xf32>,
      %cst_29 = arith.constant 0.000000e+00 : f32
      %c0_30 = arith.constant 0 : index
      %78 = memref.load %arg8[%c0_30] : memref<1xf32, #tpu.memory_space<smem>>
      memref.store %cst_29, %arg8[%c0_30] : memref<1xf32, #tpu.memory_space<smem>>
    } else {
    }
    %c0_i32_2 = arith.constant 0 : i32
    %5 = arith.cmpi eq, %arg2, %c0_i32_2 : i32
    %6 = arith.extui %5 : i1 to i32
    %c0_i32_3 = arith.constant 0 : i32
    %7 = arith.cmpi ne, %6, %c0_i32_3 : i32
    scf.if %7 {
      %cst_26 = arith.constant 0x7F800000 : f32
      %76 = vector.broadcast %cst_26 : f32 to vector<128x128xf32>
      %c0_27 = arith.constant 0 : index
      %c0_28 = arith.constant 0 : index
      %77 = vector.load %arg6[%c0_27, %c0_28] : memref<128x128xf32, #tpu.memory_space<vmem>>, vector<128x128xf32>
      tpu.vector_store %arg6[%c0_27, %c0_28], %76 {strides = array<i32>} : memref<128x128xf32, #tpu.memory_space<vmem>>, vector<128x128xf32>,
    } else {
    }
    %c0 = arith.constant 0 : index
    %c0_4 = arith.constant 0 : index
    %c0_5 = arith.constant 0 : index
    %8 = vector.load %arg3[%c0, %c0_4, %c0_5] : memref<1x32x128xf32, #tpu.memory_space<vmem>>, vector<1x32x128xf32>
    %9 = vector.shape_cast %8 : vector<1x32x128xf32> to vector<32x128xf32>
    %10 = arith.mulf %9, %9 : vector<32x128xf32>
    %cst = arith.constant 1.000000e+00 : f32
    %11 = vector.broadcast %cst : f32 to vector<32x128xf32>
    %cst_6 = arith.constant dense<0.000000e+00> : vector<128x128xf32>
    %12 = tpu.matmul %10, %11, %cst_6 {dimension_numbers = #tpu.dot_dimension_numbers<[0], [0], [1], [1], [0, 1, 1, 1], [], []>} : vector<32x128xf32>, vector<32x128xf32>, vector<128x128xf32> -> vector<128x128xf32>
    %c0_7 = arith.constant 0 : index
    %c0_8 = arith.constant 0 : index
    %13 = vector.load %arg6[%c0_7, %c0_8] : memref<128x128xf32, #tpu.memory_space<vmem>>, vector<128x128xf32>
    %c0_9 = arith.constant 0 : index
    %c0_10 = arith.constant 0 : index
    %c0_11 = arith.constant 0 : index
    %14 = vector.load %arg4[%c0_9, %c0_10, %c0_11] : memref<1x32x128xf32, #tpu.memory_space<vmem>>, vector<1x32x128xf32>
    %15 = vector.shape_cast %14 : vector<1x32x128xf32> to vector<32x128xf32>
    %16 = arith.mulf %15, %15 : vector<32x128xf32>
    %cst_12 = arith.constant dense<0.000000e+00> : vector<128xf32>
    %17 = vector.multi_reduction <add>, %16, %cst_12 [0] : vector<32x128xf32> to vector<128xf32>
    %18 = vector.shape_cast %17 : vector<128xf32> to vector<1x128xf32>
    %cst_13 = arith.constant dense<0.000000e+00> : vector<128x128xf32>
    %19 = tpu.matmul %9, %15, %cst_13 {dimension_numbers = #tpu.dot_dimension_numbers<[0], [0], [1], [1], [0, 1, 1, 1], [], []>} : vector<32x128xf32>, vector<32x128xf32>, vector<128x128xf32> -> vector<128x128xf32>
    %20 = vector.broadcast %18 : vector<1x128xf32> to vector<128x128xf32>
    %21 = arith.addf %12, %20 : vector<128x128xf32>
    %cst_14 = arith.constant 2.000000e+00 : f32
    %22 = vector.broadcast %cst_14 : f32 to vector<128x128xf32>
    %23 = arith.mulf %22, %19 : vector<128x128xf32>
    %24 = arith.subf %21, %23 : vector<128x128xf32>
    %cst_15 = arith.constant 0.000000e+00 : f32
    %25 = vector.broadcast %cst_15 : f32 to vector<128x128xf32>
    %26 = arith.maximumf %24, %25 : vector<128x128xf32>
    %27 = arith.minimumf %13, %26 : vector<128x128xf32>
    %28 = vector.extract_strided_slice %26 {offsets = [0, 0], sizes = [8, 128], strides = [1, 1]} : vector<128x128xf32> to vector<8x128xf32>
    %29 = vector.extract_strided_slice %26 {offsets = [8, 0], sizes = [8, 128], strides = [1, 1]} : vector<128x128xf32> to vector<8x128xf32>
    %30 = vector.extract_strided_slice %26 {offsets = [16, 0], sizes = [8, 128], strides = [1, 1]} : vector<128x128xf32> to vector<8x128xf32>
    %31 = vector.extract_strided_slice %26 {offsets = [24, 0], sizes = [8, 128], strides = [1, 1]} : vector<128x128xf32> to vector<8x128xf32>
    %32 = vector.extract_strided_slice %26 {offsets = [32, 0], sizes = [8, 128], strides = [1, 1]} : vector<128x128xf32> to vector<8x128xf32>
    %33 = vector.extract_strided_slice %26 {offsets = [40, 0], sizes = [8, 128], strides = [1, 1]} : vector<128x128xf32> to vector<8x128xf32>
    %34 = vector.extract_strided_slice %26 {offsets = [48, 0], sizes = [8, 128], strides = [1, 1]} : vector<128x128xf32> to vector<8x128xf32>
    %35 = vector.extract_strided_slice %26 {offsets = [56, 0], sizes = [8, 128], strides = [1, 1]} : vector<128x128xf32> to vector<8x128xf32>
    %36 = vector.extract_strided_slice %26 {offsets = [64, 0], sizes = [8, 128], strides = [1, 1]} : vector<128x128xf32> to vector<8x128xf32>
    %37 = vector.extract_strided_slice %26 {offsets = [72, 0], sizes = [8, 128], strides = [1, 1]} : vector<128x128xf32> to vector<8x128xf32>
    %38 = vector.extract_strided_slice %26 {offsets = [80, 0], sizes = [8, 128], strides = [1, 1]} : vector<128x128xf32> to vector<8x128xf32>
    %39 = vector.extract_strided_slice %26 {offsets = [88, 0], sizes = [8, 128], strides = [1, 1]} : vector<128x128xf32> to vector<8x128xf32>
    %40 = vector.extract_strided_slice %26 {offsets = [96, 0], sizes = [8, 128], strides = [1, 1]} : vector<128x128xf32> to vector<8x128xf32>
    %41 = vector.extract_strided_slice %26 {offsets = [104, 0], sizes = [8, 128], strides = [1, 1]} : vector<128x128xf32> to vector<8x128xf32>
    %42 = vector.extract_strided_slice %26 {offsets = [112, 0], sizes = [8, 128], strides = [1, 1]} : vector<128x128xf32> to vector<8x128xf32>
    %43 = vector.extract_strided_slice %26 {offsets = [120, 0], sizes = [8, 128], strides = [1, 1]} : vector<128x128xf32> to vector<8x128xf32>
    %44 = arith.minimumf %28, %29 : vector<8x128xf32>
    %45 = arith.minimumf %30, %31 : vector<8x128xf32>
    %46 = arith.minimumf %32, %33 : vector<8x128xf32>
    %47 = arith.minimumf %34, %35 : vector<8x128xf32>
    %48 = arith.minimumf %36, %37 : vector<8x128xf32>
    %49 = arith.minimumf %38, %39 : vector<8x128xf32>
    %50 = arith.minimumf %40, %41 : vector<8x128xf32>
    %51 = arith.minimumf %42, %43 : vector<8x128xf32>
    %52 = arith.minimumf %44, %45 : vector<8x128xf32>
    %53 = arith.minimumf %46, %47 : vector<8x128xf32>
    %54 = arith.minimumf %48, %49 : vector<8x128xf32>
    %55 = arith.minimumf %50, %51 : vector<8x128xf32>
    %56 = arith.minimumf %52, %53 : vector<8x128xf32>
    %57 = arith.minimumf %54, %55 : vector<8x128xf32>
    %58 = arith.minimumf %56, %57 : vector<8x128xf32>
    %c128_i32 = arith.constant 128 : i32
    %59 = arith.muli %arg2, %c128_i32 : i32
    %c0_i32_16 = arith.constant 0 : i32
    %60 = arith.addi %59, %c0_i32_16 : i32
    %61 = tpu.assume_multiple %60, 128 : i32
    %c0_17 = arith.constant 0 : index
    %62 = arith.index_cast %61 : i32 to index
    %63 = vector.load %arg7[%c0_17, %62] : memref<8x128xf32, #tpu.memory_space<vmem>>, vector<8x128xf32>
    %64 = arith.minimumf %63, %58 : vector<8x128xf32>
    %c0_18 = arith.constant 0 : index
    %65 = arith.index_cast %61 : i32 to index
    %66 = vector.load %arg7[%c0_18, %65] : memref<8x128xf32, #tpu.memory_space<vmem>>, vector<8x128xf32>
    tpu.vector_store %arg7[%c0_18, %65], %64 {strides = array<i32>} : memref<8x128xf32, #tpu.memory_space<vmem>>, vector<8x128xf32>,
    %c0_19 = arith.constant 0 : index
    %c0_20 = arith.constant 0 : index
    %67 = vector.load %arg6[%c0_19, %c0_20] : memref<128x128xf32, #tpu.memory_space<vmem>>, vector<128x128xf32>
    tpu.vector_store %arg6[%c0_19, %c0_20], %27 {strides = array<i32>} : memref<128x128xf32, #tpu.memory_space<vmem>>, vector<128x128xf32>,
    %c0_i32_21 = arith.constant 0 : i32
    %68 = arith.cmpi eq, %arg2, %c0_i32_21 : i32
    %69 = arith.extui %68 : i1 to i32
    %c0_i32_22 = arith.constant 0 : i32
    %70 = arith.cmpi ne, %69, %c0_i32_22 : i32
    scf.if %70 {
      %cst_26 = arith.constant dense<0x7F800000> : vector<128xf32>
      %76 = vector.multi_reduction <minimumf>, %27, %cst_26 [1] : vector<128x128xf32> to vector<128xf32>
      %77 = vector.shape_cast %76 : vector<128xf32> to vector<128x1xf32>
      %78 = vector.shape_cast %77 : vector<128x1xf32> to vector<1x128x1xf32>
      %cst_27 = arith.constant dense<0xFF800000> : vector<1xf32>
      %79 = vector.multi_reduction <maximumf>, %78, %cst_27 [1, 2] : vector<1x128x1xf32> to vector<1xf32>
      %80 = vector.shape_cast %79 : vector<1xf32> to vector<1x1x1xf32>
      %81 = vector.extract %80[0, 0, 0] : f32 from vector<1x1x1xf32>
      %c0_28 = arith.constant 0 : index
      %82 = memref.load %arg8[%c0_28] : memref<1xf32, #tpu.memory_space<smem>>
      %83 = arith.maximumf %82, %81 : f32
      %c0_29 = arith.constant 0 : index
      %84 = memref.load %arg8[%c0_29] : memref<1xf32, #tpu.memory_space<smem>>
      memref.store %83, %arg8[%c0_29] : memref<1xf32, #tpu.memory_space<smem>>
    } else {
    }
    %c0_i32_23 = arith.constant 0 : i32
    %71 = arith.cmpi eq, %arg1, %c0_i32_23 : i32
    %c0_i32_24 = arith.constant 0 : i32
    %72 = arith.cmpi eq, %arg2, %c0_i32_24 : i32
    %73 = arith.andi %71, %72 : i1
    %74 = arith.extui %73 : i1 to i32
    %c0_i32_25 = arith.constant 0 : i32
    %75 = arith.cmpi ne, %74, %c0_i32_25 : i32
    scf.if %75 {
      %c0_26 = arith.constant 0 : index
      %c0_27 = arith.constant 0 : index
      %76 = vector.load %arg7[%c0_26, %c0_27] : memref<8x128xf32, #tpu.memory_space<vmem>>, vector<8x128xf32>
      %cst_28 = arith.constant dense<0x7F800000> : vector<128xf32>
      %77 = vector.multi_reduction <minimumf>, %76, %cst_28 [0] : vector<8x128xf32> to vector<128xf32>
      %78 = vector.shape_cast %77 : vector<128xf32> to vector<1x128xf32>
      %79 = vector.shape_cast %78 : vector<1x128xf32> to vector<1x1x128xf32>
      %cst_29 = arith.constant dense<0xFF800000> : vector<1xf32>
      %80 = vector.multi_reduction <maximumf>, %79, %cst_29 [1, 2] : vector<1x1x128xf32> to vector<1xf32>
      %81 = vector.shape_cast %80 : vector<1xf32> to vector<1x1x1xf32>
      %82 = vector.extract %81[0, 0, 0] : f32 from vector<1x1x1xf32>
      %c0_30 = arith.constant 0 : index
      %83 = memref.load %arg8[%c0_30] : memref<1xf32, #tpu.memory_space<smem>>
      %84 = arith.maximumf %83, %82 : f32
      %85 = vector.broadcast %84 : f32 to vector<8x128xf32>
      %86 = math.sqrt %85 : vector<8x128xf32>
      %c0_31 = arith.constant 0 : index
      %c0_32 = arith.constant 0 : index
      %c0_33 = arith.constant 0 : index
      %87 = vector.load %arg5[%c0_31, %c0_32, %c0_33] : memref<1x8x128xf32, #tpu.memory_space<vmem>>, vector<1x8x128xf32>
      %88 = vector.shape_cast %87 : vector<1x8x128xf32> to vector<8x128xf32>
      %89 = vector.shape_cast %86 : vector<8x128xf32> to vector<1x8x128xf32>
      tpu.vector_store %arg5[%c0_31, %c0_32, %c0_33], %89 {strides = array<i32>} : memref<1x8x128xf32, #tpu.memory_space<vmem>>, vector<1x8x128xf32>,
    } else {
    }
    return
  }
  func.func @transform_0(%arg0: i32, %arg1: i32, %arg2: i32) -> (i32, i32, i32) {
    %c0_i32 = arith.constant 0 : i32
    %c0_i32_0 = arith.constant 0 : i32
    return %arg0, %c0_i32, %arg1 : i32, i32, i32
  }
  func.func @transform_1(%arg0: i32, %arg1: i32, %arg2: i32) -> (i32, i32, i32) {
    %c0_i32 = arith.constant 0 : i32
    %c0_i32_0 = arith.constant 0 : i32
    return %arg0, %c0_i32, %arg2 : i32, i32, i32
  }
  func.func @transform_2(%arg0: i32, %arg1: i32, %arg2: i32) -> (i32, i32, i32) {
    %c0_i32 = arith.constant 0 : i32
    %c0_i32_0 = arith.constant 0 : i32
    %c0_i32_1 = arith.constant 0 : i32
    return %arg0, %c0_i32, %c0_i32_0 : i32, i32, i32
  }
}

</mosaic_0001>

<llo_original>
// kernel: hausdorff_loss.1
$region0: #{hausdorff_loss.1}
  #allocation0 [shape = 'u32[]', space=smem, size = 0x4, offset = 0x4, fixed_abs, tag = 'smem constant byte address 0x4 - core index']
  #allocation1 [shape = 'u32[144,128]{1,0:T(1,128)}', space=vmem, size = 0x12000, scoped, tag = 'internal scratch']
  #allocation2 [shape = 'f32[128,128]{1,0:T(8,128)}', space=vmem, size = 0x10000, scoped, tag = 'scratch operand']
  #allocation3 [shape = 'f32[8,128]{1,0:T(8,128)}', space=vmem, size = 0x1000, scoped, tag = 'scratch operand']
  #allocation4 [shape = 'f32[1]{0:T(128)}', space=smem, size = 0x200, scoped, tag = 'scratch operand']
  %s0 = inlined_call_operand.vmem [shape: f32[2,32,128], index: 0, kind: input, shape index: {}]
  %s1 = inlined_call_operand.vmem [shape: f32[2,32,128], index: 1, kind: input, shape index: {}]
  %s2 = inlined_call_operand.vmem [shape: f32[2,8,128], index: 2, kind: output, shape index: {}]
  %s3 = sld [smem:[#allocation0]]
  $region57: #{hausdorff_loss.1} parent=0
    _
  %s5 = ssub.s32 1, %s3
  %s6 = scalar_select 0, %s5, %s3
  loop: start=0, step=1, limit=4
  $region2: #{hausdorff_loss.1} parent=0 // loop_pre_header
    _
  $region3: #{hausdorff_loss.1} parent=0 // loop_header
    %s8 = sphi 0, %s12
    %p9 = scmp.ge.s32.totalorder %s8, 4
    %s15 = sphi 0, %s34
    %s16 = sphi 0, %s30
    %s17 = sphi 0, %s26
    %s18 = sphi 0, %s15
    %s19 = sphi 0, %s16
    %s20 = sphi 0, %s17
    %s21 = sphi 0, %s18
    %s22 = sphi 0, %s19
    %s23 = sphi 0, %s20
    %s39 = sphi 0, %s41
    %s42 = sphi 0, %s39
    %s43 = sphi 0, %s42
    %s59 = sphi 0, %s43
    %s67 = sphi 0, %s69
    %s70 = sphi 0, %s67
    %s71 = sphi 0, %s70
    %s87 = sphi 0, %s71
    %s93 = sphi 0, %s95
    %s96 = sphi 0, %s93
    %s97 = sphi 0, %s96
    %s113 = sphi 0, %s97
  $region4: #{hausdorff_loss.1} parent=0 // loop_header_branch
    %11 = sbr.rel (%p9) target = $region8
  $region5: #{hausdorff_loss.1} parent=0 // loop_body
    %s13 = ssub.s32 %s8, 1
    %s14 = ssub.s32 %s8, 2
    %s24 = sadd.s32 1, %s17
    %p25 = scmp.ge.s32.totalorder %s24, 1
    %s26 = scalar_select %p25, 0, %s24
    %s27 = sadd.s32 1, %s16
    %s28 = scalar_select %p25, %s27, %s16
    %p29 = scmp.ge.s32.totalorder %s28, 1
    %s30 = scalar_select %p29, 0, %s28
    %s31 = sadd.s32 1, %s15
    %s32 = scalar_select %p29, %s31, %s15
    %p33 = scmp.ge.s32.totalorder %s32, 2
    %s34 = scalar_select %p33, 0, %s32
    %s35 = ssub.s32 %s15, %s34
    %s36 = ssub.s32 %s16, %s30
    %s37 = sor.u32 %s35, %s36
    %p38 = scmp.eq.s32.totalorder %s37, 0
    %s40 = sadd.s32 %s39, 1
    %s41 = scalar_select %p38, %s39, %s40
    %p44 = pneg %p38
    %p45 = scmp.eq.s32.totalorder %s8, 1
    %p46 = por %p44, %p45
    %p47 = scmp.ne.s32.totalorder %s39, %s42
    %p48 = scmp.eq.s32.totalorder %s8, 0
    %p49 = por %p47, %p48
    %p50 = scmp.ne.s32.totalorder %s39, %s42
    %p51 = scmp.eq.s32.totalorder %s13, 1
    %p52 = por %p50, %p51
    %p53 = scmp.ne.s32.totalorder %s42, %s43
    %p54 = scmp.eq.s32.totalorder %s13, 0
    %p55 = por %p53, %p54
    %p56 = scmp.ne.s32.totalorder %s42, %s43
    %p57 = scmp.eq.s32.totalorder %s14, 1
    %p58 = por %p56, %p57
    %p60 = scmp.ne.s32.totalorder %s43, %s59
    %p61 = scmp.eq.s32.totalorder %s14, 0
    %p62 = por %p60, %p61
    %s63 = ssub.s32 %s15, %s34
    %s64 = ssub.s32 %s17, %s26
    %s65 = sor.u32 %s63, %s64
    %p66 = scmp.eq.s32.totalorder %s65, 0
    %s68 = sadd.s32 %s67, 1
    %s69 = scalar_select %p66, %s67, %s68
    %p72 = pneg %p66
    %p73 = scmp.eq.s32.totalorder %s8, 1
    %p74 = por %p72, %p73
    %p75 = scmp.ne.s32.totalorder %s67, %s70
    %p76 = scmp.eq.s32.totalorder %s8, 0
    %p77 = por %p75, %p76
    %p78 = scmp.ne.s32.totalorder %s67, %s70
    %p79 = scmp.eq.s32.totalorder %s13, 1
    %p80 = por %p78, %p79
    %p81 = scmp.ne.s32.totalorder %s70, %s71
    %p82 = scmp.eq.s32.totalorder %s13, 0
    %p83 = por %p81, %p82
    %p84 = scmp.ne.s32.totalorder %s70, %s71
    %p85 = scmp.eq.s32.totalorder %s14, 1
    %p86 = por %p84, %p85
    %p88 = scmp.ne.s32.totalorder %s71, %s87
    %p89 = scmp.eq.s32.totalorder %s14, 0
    %p90 = por %p88, %p89
    %s91 = ssub.s32 %s15, %s34
    %p92 = scmp.eq.s32.totalorder %s91, 0
    %s94 = sadd.s32 %s93, 1
    %s95 = scalar_select %p92, %s93, %s94
    %p98 = pneg %p92
    %p99 = scmp.eq.s32.totalorder %s8, 1
    %p100 = por %p98, %p99
    %p101 = scmp.ne.s32.totalorder %s93, %s96
    %p102 = scmp.eq.s32.totalorder %s8, 0
    %p103 = por %p101, %p102
    %p104 = scmp.ne.s32.totalorder %s93, %s96
    %p105 = scmp.eq.s32.totalorder %s13, 1
    %p106 = por %p104, %p105
    %p107 = scmp.ne.s32.totalorder %s96, %s97
    %p108 = scmp.eq.s32.totalorder %s13, 0
    %p109 = por %p107, %p108
    %p110 = scmp.ne.s32.totalorder %s96, %s97
    %p111 = scmp.eq.s32.totalorder %s14, 1
    %p112 = por %p110, %p111
    %p114 = scmp.ne.s32.totalorder %s97, %s113
    %p115 = scmp.eq.s32.totalorder %s14, 0
    %p116 = por %p114, %p115
    %p117 = scmp.le.s32.totalorder 1, %s8
    %p118 = scmp.lt.s32.totalorder %s8, 3
    %p119 = pnand %p117, %p118
    %p120 = pneg %p119
    // Predicated region
    $region9: #{hausdorff_loss.1} parent=5 // pred_check
      _
    $region10: #{hausdorff_loss.1} parent=5 // pred_check_branch
      %122 = sbr.rel (%p119) target = $region12
    $region11: #{hausdorff_loss.1} parent=5 // pred_region
      %s123 = ssub.s32 %s8, 1
    $region12: #{hausdorff_loss.1} parent=5 // pred_fallthru
      _
    %p124 = scmp.lt.s32.totalorder %s8, 2
    // Predicated region
    $region13: #{hausdorff_loss.1} parent=5 // pred_check
      %p125 = pneg %p124
    $region14: #{hausdorff_loss.1} parent=5 // pred_check_branch
      %127 = sbr.rel (%p125) target = $region16
    $region15: #{hausdorff_loss.1} parent=5 // pred_region
      // Predicated region
      $region17: #{hausdorff_loss.1} parent=15 // pred_check
        %p128 = pneg %p49
      $region18: #{hausdorff_loss.1} parent=15 // pred_check_branch
        %130 = sbr.rel (%p128) target = $region20
      $region19: #{hausdorff_loss.1} parent=15 // pred_region
        %p131 = scmp.lt.s32.totalorder %s15, 1
        %s132 = scalar_select %p131, %s15, 1
        %p133 = scmp.lt.s32.totalorder %s16, 0
        %s134 = scalar_select %p133, %s16, 0
        %s135 = smul.addr %s132, 4
        %s136 = sadd.s32 %s134, %s135
        %s137 = smul.addr %s136, 8
        %s138 = scalar_lea.vmem %s0, %s137
      $region20: #{hausdorff_loss.1} parent=15 // pred_fallthru
        _
      // Predicated region
      $region21: #{hausdorff_loss.1} parent=15 // pred_check
        %p139 = pneg %p77
      $region22: #{hausdorff_loss.1} parent=15 // pred_check_branch
        %141 = sbr.rel (%p139) target = $region24
      $region23: #{hausdorff_loss.1} parent=15 // pred_region
        %p142 = scmp.lt.s32.totalorder %s15, 1
        %s143 = scalar_select %p142, %s15, 1
        %p144 = scmp.lt.s32.totalorder %s17, 0
        %s145 = scalar_select %p144, %s17, 0
        %s146 = smul.addr %s143, 4
        %s147 = sadd.s32 %s145, %s146
        %s148 = smul.addr %s147, 8
        %s149 = scalar_lea.vmem %s1, %s148
      $region24: #{hausdorff_loss.1} parent=15 // pred_fallthru
        _
    $region16: #{hausdorff_loss.1} parent=5 // pred_fallthru
      _
    %p150 = scmp.le.s32.totalorder 1, %s8
    %p151 = scmp.lt.s32.totalorder %s8, 3
    %p152 = pnand %p150, %p151
    %p153 = pneg %p152
    // Predicated region
    $region25: #{hausdorff_loss.1} parent=5 // pred_check
      _
    $region26: #{hausdorff_loss.1} parent=5 // pred_check_branch
      %155 = sbr.rel (%p152) target = $region28
    $region27: #{hausdorff_loss.1} parent=5 // pred_region
      %s156 = ssub.s32 %s8, 1
      %p157 = scmp.lt.s32.totalorder %s18, 1
      %s158 = scalar_select %p157, %s18, 1
      %p159 = scmp.lt.s32.totalorder %s19, 0
      %s160 = scalar_select %p159, %s19, 0
      %s161 = smul.addr %s158, 4
      %s162 = sadd.s32 %s160, %s161
      %s163 = smul.addr %s162, 8
      %s164 = scalar_lea.vmem %s0, %s163
      %p165 = pneg %p55
      %p166 = pneg %p52
      %p167 = scmp.lt.s32.totalorder %s18, 1
      %s168 = scalar_select %p167, %s18, 1
      %p169 = scmp.lt.s32.totalorder %s20, 0
      %s170 = scalar_select %p169, %s20, 0
      %s171 = smul.addr %s168, 4
      %s172 = sadd.s32 %s170, %s171
      %s173 = smul.addr %s172, 8
      %s174 = scalar_lea.vmem %s1, %s173
      %p175 = pneg %p83
      %p176 = pneg %p80
      %p177 = pneg %p109
      %p178 = pneg %p106
      %p179 = scmp.lt.s32.totalorder %s18, 1
      %s180 = scalar_select %p179, %s18, 1
      %s181 = smul.addr %s180, 8
      %s182 = scalar_lea.vmem %s2, %s181
      %p183 = scmp.lt.s32.totalorder %s18, 1
      %s184 = scalar_select %p183, %s18, 1
      %p185 = scmp.lt.s32.totalorder %s19, 0
      %s186 = scalar_select %p185, %s19, 0
      %s187 = smul.addr %s184, 4
      %s188 = sadd.s32 %s186, %s187
      %s189 = smul.addr %s188, 8
      %s190 = scalar_lea.vmem %s0, %s189
      %p191 = scmp.lt.s32.totalorder %s18, 1
      %s192 = scalar_select %p191, %s18, 1
      %p193 = scmp.lt.s32.totalorder %s20, 0
      %s194 = scalar_select %p193, %s20, 0
      %s195 = smul.addr %s192, 4
      %s196 = sadd.s32 %s194, %s195
      %s197 = smul.addr %s196, 8
      %s198 = scalar_lea.vmem %s1, %s197
      %p199 = scmp.lt.s32.totalorder %s18, 1
      %s200 = scalar_select %p199, %s18, 1
      %s201 = smul.addr %s200, 8
      %s202 = scalar_lea.vmem %s2, %s201
      %p203 = scmp.eq.s32.totalorder %s19, 0
      %p204 = scmp.eq.s32.totalorder %s20, 0
      %p205 = pnand %p203, %p204
      %p206 = pneg %p205
      // Predicated region
      $region29: #{hausdorff_loss.1} parent=27 // pred_check
        _
      $region30: #{hausdorff_loss.1} parent=27 // pred_check_branch
        %208 = sbr.rel (%p205) target = $region32
      $region31: #{hausdorff_loss.1} parent=27 // pred_region
        %209 = vst [vmem:[#allocation3] sm:$0xff] inf
        %s210 = scalar_lea.smem [#allocation4], 0
        %211 = sst [smem:[%s210]] 0.0
      $region32: #{hausdorff_loss.1} parent=27 // pred_fallthru
        _
      // Predicated region
      $region33: #{hausdorff_loss.1} parent=27 // pred_check
        %p212 = pneg %p204
      $region34: #{hausdorff_loss.1} parent=27 // pred_check_branch
        %214 = sbr.rel (%p212) target = $region36
      $region35: #{hausdorff_loss.1} parent=27 // pred_region
        %215 = vst [vmem:[#allocation2] sm:$0xff] inf
        %216 = vst [vmem:[#allocation2 + $0x8] sm:$0xff] inf
        %217 = vst [vmem:[#allocation2 + $0x10] sm:$0xff] inf
        %218 = vst [vmem:[#allocation2 + $0x18] sm:$0xff] inf
        %219 = vst [vmem:[#allocation2 + $0x20] sm:$0xff] inf
        %220 = vst [vmem:[#allocation2 + $0x28] sm:$0xff] inf
        %221 = vst [vmem:[#allocation2 + $0x30] sm:$0xff] inf
        %222 = vst [vmem:[#allocation2 + $0x38] sm:$0xff] inf
        %223 = vst [vmem:[#allocation2 + $0x40] sm:$0xff] inf
        %224 = vst [vmem:[#allocation2 + $0x48] sm:$0xff] inf
        %225 = vst [vmem:[#allocation2 + $0x50] sm:$0xff] inf
        %226 = vst [vmem:[#allocation2 + $0x58] sm:$0xff] inf
        %227 = vst [vmem:[#allocation2 + $0x60] sm:$0xff] inf
        %228 = vst [vmem:[#allocation2 + $0x68] sm:$0xff] inf
        %229 = vst [vmem:[#allocation2 + $0x70] sm:$0xff] inf
        %230 = vst [vmem:[#allocation2 + $0x78] sm:$0xff] inf
      $region36: #{hausdorff_loss.1} parent=27 // pred_fallthru
        _
      %v231 = vld [vmem:[%s190] sm:$0xff]
      %v232 = vld [vmem:[%s190 + $0x8] sm:$0xff]
      %v233 = vld [vmem:[%s190 + $0x10] sm:$0xff]
      %v234 = vld [vmem:[%s190 + $0x18] sm:$0xff]
      %v235 = vmul.f32 %v231, %v231
      %v236 = vmul.f32 %v232, %v232
      %v237 = vmul.f32 %v233, %v233
      %v238 = vmul.f32 %v234, %v234
      %v239 = vld [vmem:[#allocation2] sm:$0xff]
      %v240 = vld [vmem:[#allocation2 + $0x8] sm:$0xff]
      %v241 = vld [vmem:[#allocation2 + $0x10] sm:$0xff]
      %v242 = vld [vmem:[#allocation2 + $0x18] sm:$0xff]
      %v243 = vld [vmem:[#allocation2 + $0x20] sm:$0xff]
      %v244 = vld [vmem:[#allocation2 + $0x28] sm:$0xff]
      %v245 = vld [vmem:[#allocation2 + $0x30] sm:$0xff]
      %v246 = vld [vmem:[#allocation2 + $0x38] sm:$0xff]
      %v247 = vld [vmem:[#allocation2 + $0x40] sm:$0xff]
      %v248 = vld [vmem:[#allocation2 + $0x48] sm:$0xff]
      %v249 = vld [vmem:[#allocation2 + $0x50] sm:$0xff]
      %v250 = vld [vmem:[#allocation2 + $0x58] sm:$0xff]
      %v251 = vld [vmem:[#allocation2 + $0x60] sm:$0xff]
      %v252 = vld [vmem:[#allocation2 + $0x68] sm:$0xff]
      %v253 = vld [vmem:[#allocation2 + $0x70] sm:$0xff]
      %v254 = vld [vmem:[#allocation2 + $0x78] sm:$0xff]
      %v255 = vld [vmem:[%s198] sm:$0xff]
      %v256 = vld [vmem:[%s198 + $0x8] sm:$0xff]
      %v257 = vld [vmem:[%s198 + $0x10] sm:$0xff]
      %v258 = vld [vmem:[%s198 + $0x18] sm:$0xff]
      %v259 = vmul.f32 %v255, %v255
      %v260 = vmul.f32 %v256, %v256
      %v261 = vmul.f32 %v257, %v257
      %v262 = vmul.f32 %v258, %v258
      %v263 = vadd.f32 %v259, %v260
      %v264 = vadd.f32 %v263, %v261
      %v265 = vadd.f32 %v264, %v262
      %v266 = vrot.slane %v265, 4
      %v267 = vadd.f32 %v265, %v266
      %v268 = vrot.slane %v267, 2
      %v269 = vadd.f32 %v267, %v268
      %v270 = vrot.slane %v269, 1
      %v271 = vadd.f32 %v269, %v270
      %272 = vxpose.xlu0.b32.start [1/16] %v231, 128
      %273 = vxpose.xlu0.b32.cont [2/16] %v232, 128
      %274 = vxpose.xlu0.b32.cont [3/16] %v233, 128
      %275 = vxpose.xlu0.b32.cont [4/16] %v234, 128
      %276 = vxpose.xlu0.b32.cont [5/16] 0.0, 128
      %277 = vxpose.xlu0.b32.cont [6/16] 0.0, 128
      %278 = vxpose.xlu0.b32.cont [7/16] 0.0, 128
      %279 = vxpose.xlu0.b32.cont [8/16] 0.0, 128
      %280 = vxpose.xlu0.b32.cont [9/16] 0.0, 128
      %281 = vxpose.xlu0.b32.cont [10/16] 0.0, 128
      %282 = vxpose.xlu0.b32.cont [11/16] 0.0, 128
      %283 = vxpose.xlu0.b32.cont [12/16] 0.0, 128
      %284 = vxpose.xlu0.b32.cont [13/16] 0.0, 128
      %285 = vxpose.xlu0.b32.cont [14/16] 0.0, 128
      %286 = vxpose.xlu0.b32.cont [15/16] 0.0, 128
      %287 = vxpose.xlu0.b32.end [16/16] 0.0, 128
      %v288 = vpop.trf.xlu0
      %v289 = vpop.trf.xlu0
      %v290 = vpop.trf.xlu0
      %v291 = vpop.trf.xlu0
      %v292 = vpop.trf.xlu0
      %v293 = vpop.trf.xlu0
      %v294 = vpop.trf.xlu0
      %v295 = vpop.trf.xlu0
      %v296 = vpop.trf.xlu0
      %v297 = vpop.trf.xlu0
      %v298 = vpop.trf.xlu0
      %v299 = vpop.trf.xlu0
      %v300 = vpop.trf.xlu0
      %v301 = vpop.trf.xlu0
      %v302 = vpop.trf.xlu0
      %v303 = vpop.trf.xlu0
      %vm304 = vcmask 261120
      %v306 = vsel %vm304, %v288, 0
      %v309 = vsel %vm304, %v289, 0
      %v312 = vsel %vm304, %v290, 0
      %v315 = vsel %vm304, %v291, 0
      %v318 = vsel %vm304, %v292, 0
      %v321 = vsel %vm304, %v293, 0
      %v324 = vsel %vm304, %v294, 0
      %v327 = vsel %vm304, %v295, 0
      %v330 = vsel %vm304, %v296, 0
      %v333 = vsel %vm304, %v297, 0
      %v336 = vsel %vm304, %v298, 0
      %v339 = vsel %vm304, %v299, 0
      %v342 = vsel %vm304, %v300, 0
      %v345 = vsel %vm304, %v301, 0
      %v348 = vsel %vm304, %v302, 0
      %v351 = vsel %vm304, %v303, 0
      %353 = vmatprep.subr.mxu0 0.0
      %354 = vmatpush1.msra.mxu0 %v255
      %355 = vmatprep.subr.mxu0 0.0
      %356 = vmatpush1.msra.mxu0 %v256
      %357 = vmatprep.subr.mxu0 0.0
      %358 = vmatpush1.msra.mxu0 %v257
      %359 = vmatprep.subr.mxu0 0.0
      %360 = vmatpush1.msra.mxu0 %v258
      %361 = vmatprep.subr.mxu0 0.0
      %362 = vmatpush1.msra.mxu0 0.0
      %363 = vmatprep.subr.mxu0 0.0
      %364 = vmatpush1.msra.mxu0 0.0
      %365 = vmatprep.subr.mxu0 0.0
      %366 = vmatpush1.msra.mxu0 0.0
      %367 = vmatprep.subr.mxu0 0.0
      %368 = vmatpush1.msra.mxu0 0.0
      %369 = vmatprep.subr.mxu0 0.0
      %370 = vmatpush1.msra.mxu0 0.0
      %371 = vmatprep.subr.mxu0 0.0
      %372 = vmatpush1.msra.mxu0 0.0
      %373 = vmatprep.subr.mxu0 0.0
      %374 = vmatpush1.msra.mxu0 0.0
      %375 = vmatprep.subr.mxu0 0.0
      %376 = vmatpush1.msra.mxu0 0.0
      %377 = vmatprep.subr.mxu0 0.0
      %378 = vmatpush1.msra.mxu0 0.0
      %379 = vmatprep.subr.mxu0 0.0
      %380 = vmatpush1.msra.mxu0 0.0
      %381 = vmatprep.subr.mxu0 0.0
      %382 = vmatpush1.msra.mxu0 0.0
      %383 = vmatprep.subr.mxu0 0.0
      %384 = vmatpush1.msra.mxu0 0.0
      %385 = vmatprep.subr.mxu0 0.0
      %386 = vmatpush1.msra.mxu0 0.0
      %387 = vmatprep.subr.mxu0 0.0
      %388 = vmatpush1.msra.mxu0 0.0
      %389 = vmatprep.subr.mxu0 0.0
      %390 = vmatpush1.msra.mxu0 0.0
      %391 = vmatprep.subr.mxu0 0.0
      %392 = vmatpush1.msra.mxu0 0.0
      %393 = vmatprep.subr.mxu0 0.0
      %394 = vmatpush1.msra.mxu0 0.0
      %395 = vmatprep.subr.mxu0 0.0
      %396 = vmatpush1.msra.mxu0 0.0
      %397 = vmatprep.subr.mxu0 0.0
      %398 = vmatpush1.msra.mxu0 0.0
      %399 = vmatprep.subr.mxu0 0.0
      %400 = vmatpush1.msra.mxu0 0.0
      %401 = vmatprep.subr.mxu0 0.0
      %402 = vmatpush1.msra.mxu0 0.0
      %403 = vmatprep.subr.mxu0 0.0
      %404 = vmatpush1.msra.mxu0 0.0
      %405 = vmatprep.subr.mxu0 0.0
      %406 = vmatpush1.msra.mxu0 0.0
      %407 = vmatprep.subr.mxu0 0.0
      %408 = vmatpush1.msra.mxu0 0.0
      %409 = vmatprep.subr.mxu0 0.0
      %410 = vmatpush1.msra.mxu0 0.0
      %411 = vmatprep.subr.mxu0 0.0
      %412 = vmatpush1.msra.mxu0 0.0
      %413 = vmatprep.subr.mxu0 0.0
      %414 = vmatpush1.msra.mxu0 0.0
      %415 = vmatprep.subr.mxu0 0.0
      %416 = vmatpush1.msra.mxu0 0.0
      %417 = vmatprep.mubr.f32.mxu0 0.0
      %418 = vmatmul.mubr.f32.gmra.mrb[0].mxu0 %v306
      %v419 = vpop.f32.mrb[0].mxu0
      %v420 = vadd.f32 0.0, %v419
      %v421 = vpop.f32.mrb[0].mxu0
      %422 = vmatprep.mubr.f32.mxu0 0.0
      %423 = vmatmul.mubr.f32.gmra.mrb[0].mxu0 %v309
      %v424 = vpop.f32.mrb[0].mxu0
      %v425 = vadd.f32 0.0, %v424
      %v426 = vpop.f32.mrb[0].mxu0
      %427 = vmatprep.mubr.f32.mxu0 0.0
      %428 = vmatmul.mubr.f32.gmra.mrb[0].mxu0 %v312
      %v429 = vpop.f32.mrb[0].mxu0
      %v430 = vadd.f32 0.0, %v429
      %v431 = vpop.f32.mrb[0].mxu0
      %432 = vmatprep.mubr.f32.mxu0 0.0
      %433 = vmatmul.mubr.f32.gmra.mrb[0].mxu0 %v315
      %v434 = vpop.f32.mrb[0].mxu0
      %v435 = vadd.f32 0.0, %v434
      %v436 = vpop.f32.mrb[0].mxu0
      %437 = vmatprep.mubr.f32.mxu0 0.0
      %438 = vmatmul.mubr.f32.gmra.mrb[0].mxu0 %v318
      %v439 = vpop.f32.mrb[0].mxu0
      %v440 = vadd.f32 0.0, %v439
      %v441 = vpop.f32.mrb[0].mxu0
      %442 = vmatprep.mubr.f32.mxu0 0.0
      %443 = vmatmul.mubr.f32.gmra.mrb[0].mxu0 %v321
      %v444 = vpop.f32.mrb[0].mxu0
      %v445 = vadd.f32 0.0, %v444
      %v446 = vpop.f32.mrb[0].mxu0
      %447 = vmatprep.mubr.f32.mxu0 0.0
      %448 = vmatmul.mubr.f32.gmra.mrb[0].mxu0 %v324
      %v449 = vpop.f32.mrb[0].mxu0
      %v450 = vadd.f32 0.0, %v449
      %v451 = vpop.f32.mrb[0].mxu0
      %452 = vmatprep.mubr.f32.mxu0 0.0
      %453 = vmatmul.mubr.f32.gmra.mrb[0].mxu0 %v327
      %v454 = vpop.f32.mrb[0].mxu0
      %v455 = vadd.f32 0.0, %v454
      %v456 = vpop.f32.mrb[0].mxu0
      %457 = vmatprep.mubr.f32.mxu0 0.0
      %458 = vmatmul.mubr.f32.gmra.mrb[0].mxu0 %v330
      %v459 = vpop.f32.mrb[0].mxu0
      %v460 = vadd.f32 0.0, %v459
      %v461 = vpop.f32.mrb[0].mxu0
      %462 = vmatprep.mubr.f32.mxu0 0.0
      %463 = vmatmul.mubr.f32.gmra.mrb[0].mxu0 %v333
      %v464 = vpop.f32.mrb[0].mxu0
      %v465 = vadd.f32 0.0, %v464
      %v466 = vpop.f32.mrb[0].mxu0
      %467 = vmatprep.mubr.f32.mxu0 0.0
      %468 = vmatmul.mubr.f32.gmra.mrb[0].mxu0 %v336
      %v469 = vpop.f32.mrb[0].mxu0
      %v470 = vadd.f32 0.0, %v469
      %v471 = vpop.f32.mrb[0].mxu0
      %472 = vmatprep.mubr.f32.mxu0 0.0
      %473 = vmatmul.mubr.f32.gmra.mrb[0].mxu0 %v339
      %v474 = vpop.f32.mrb[0].mxu0
      %v475 = vadd.f32 0.0, %v474
      %v476 = vpop.f32.mrb[0].mxu0
      %477 = vmatprep.mubr.f32.mxu0 0.0
      %478 = vmatmul.mubr.f32.gmra.mrb[0].mxu0 %v342
      %v479 = vpop.f32.mrb[0].mxu0
      %v480 = vadd.f32 0.0, %v479
      %v481 = vpop.f32.mrb[0].mxu0
      %482 = vmatprep.mubr.f32.mxu0 0.0
      %483 = vmatmul.mubr.f32.gmra.mrb[0].mxu0 %v345
      %v484 = vpop.f32.mrb[0].mxu0
      %v485 = vadd.f32 0.0, %v484
      %v486 = vpop.f32.mrb[0].mxu0
      %487 = vmatprep.mubr.f32.mxu0 0.0
      %488 = vmatmul.mubr.f32.gmra.mrb[0].mxu0 %v348
      %v489 = vpop.f32.mrb[0].mxu0
      %v490 = vadd.f32 0.0, %v489
      %v491 = vpop.f32.mrb[0].mxu0
      %492 = vmatprep.mubr.f32.mxu0 0.0
      %493 = vmatmul.mubr.f32.gmra.mrb[0].mxu0 %v351
      %v494 = vpop.f32.mrb[0].mxu0
      %v495 = vadd.f32 0.0, %v494
      %v496 = vpop.f32.mrb[0].mxu0
      %497 = vdwg.mxu0
      %498 = vxpose.xlu0.b32.start [1/16] %v235, 128
      %499 = vxpose.xlu0.b32.cont [2/16] %v236, 128
      %500 = vxpose.xlu0.b32.cont [3/16] %v237, 128
      %501 = vxpose.xlu0.b32.cont [4/16] %v238, 128
      %502 = vxpose.xlu0.b32.cont [5/16] 0.0, 128
      %503 = vxpose.xlu0.b32.cont [6/16] 0.0, 128
      %504 = vxpose.xlu0.b32.cont [7/16] 0.0, 128
      %505 = vxpose.xlu0.b32.cont [8/16] 0.0, 128
      %506 = vxpose.xlu0.b32.cont [9/16] 0.0, 128
      %507 = vxpose.xlu0.b32.cont [10/16] 0.0, 128
      %508 = vxpose.xlu0.b32.cont [11/16] 0.0, 128
      %509 = vxpose.xlu0.b32.cont [12/16] 0.0, 128
      %510 = vxpose.xlu0.b32.cont [13/16] 0.0, 128
      %511 = vxpose.xlu0.b32.cont [14/16] 0.0, 128
      %512 = vxpose.xlu0.b32.cont [15/16] 0.0, 128
      %513 = vxpose.xlu0.b32.end [16/16] 0.0, 128
      %v514 = vpop.trf.xlu0
      %v515 = vpop.trf.xlu0
      %v516 = vpop.trf.xlu0
      %v517 = vpop.trf.xlu0
      %v518 = vpop.trf.xlu0
      %v519 = vpop.trf.xlu0
      %v520 = vpop.trf.xlu0
      %v521 = vpop.trf.xlu0
      %v522 = vpop.trf.xlu0
      %v523 = vpop.trf.xlu0
      %v524 = vpop.trf.xlu0
      %v525 = vpop.trf.xlu0
      %v526 = vpop.trf.xlu0
      %v527 = vpop.trf.xlu0
      %v528 = vpop.trf.xlu0
      %v529 = vpop.trf.xlu0
      %v531 = vsel %vm304, %v514, 0
      %v534 = vsel %vm304, %v515, 0
      %v537 = vsel %vm304, %v516, 0
      %v540 = vsel %vm304, %v517, 0
      %v543 = vsel %vm304, %v518, 0
      %v546 = vsel %vm304, %v519, 0
      %v549 = vsel %vm304, %v520, 0
      %v552 = vsel %vm304, %v521, 0
      %v555 = vsel %vm304, %v522, 0
      %v558 = vsel %vm304, %v523, 0
      %v561 = vsel %vm304, %v524, 0
      %v564 = vsel %vm304, %v525, 0
      %v567 = vsel %vm304, %v526, 0
      %v570 = vsel %vm304, %v527, 0
      %v573 = vsel %vm304, %v528, 0
      %v576 = vsel %vm304, %v529, 0
      %578 = vmatprep.subr.mxu0 0.0
      %579 = vmatpush1.msra.mxu0 1.0
      %580 = vmatprep.subr.mxu0 0.0
      %581 = vmatpush1.msra.mxu0 1.0
      %582 = vmatprep.subr.mxu0 0.0
      %583 = vmatpush1.msra.mxu0 1.0
      %584 = vmatprep.subr.mxu0 0.0
      %585 = vmatpush1.msra.mxu0 1.0
      %586 = vmatprep.subr.mxu0 0.0
      %587 = vmatpush1.msra.mxu0 0.0
      %588 = vmatprep.subr.mxu0 0.0
      %589 = vmatpush1.msra.mxu0 0.0
      %590 = vmatprep.subr.mxu0 0.0
      %591 = vmatpush1.msra.mxu0 0.0
      %592 = vmatprep.subr.mxu0 0.0
      %593 = vmatpush1.msra.mxu0 0.0
      %594 = vmatprep.subr.mxu0 0.0
      %595 = vmatpush1.msra.mxu0 0.0
      %596 = vmatprep.subr.mxu0 0.0
      %597 = vmatpush1.msra.mxu0 0.0
      %598 = vmatprep.subr.mxu0 0.0
      %599 = vmatpush1.msra.mxu0 0.0
      %600 = vmatprep.subr.mxu0 0.0
      %601 = vmatpush1.msra.mxu0 0.0
      %602 = vmatprep.subr.mxu0 0.0
      %603 = vmatpush1.msra.mxu0 0.0
      %604 = vmatprep.subr.mxu0 0.0
      %605 = vmatpush1.msra.mxu0 0.0
      %606 = vmatprep.subr.mxu0 0.0
      %607 = vmatpush1.msra.mxu0 0.0
      %608 = vmatprep.subr.mxu0 0.0
      %609 = vmatpush1.msra.mxu0 0.0
      %610 = vmatprep.subr.mxu0 0.0
      %611 = vmatpush1.msra.mxu0 0.0
      %612 = vmatprep.subr.mxu0 0.0
      %613 = vmatpush1.msra.mxu0 0.0
      %614 = vmatprep.subr.mxu0 0.0
      %615 = vmatpush1.msra.mxu0 0.0
      %616 = vmatprep.subr.mxu0 0.0
      %617 = vmatpush1.msra.mxu0 0.0
      %618 = vmatprep.subr.mxu0 0.0
      %619 = vmatpush1.msra.mxu0 0.0
      %620 = vmatprep.subr.mxu0 0.0
      %621 = vmatpush1.msra.mxu0 0.0
      %622 = vmatprep.subr.mxu0 0.0
      %623 = vmatpush1.msra.mxu0 0.0
      %624 = vmatprep.subr.mxu0 0.0
      %625 = vmatpush1.msra.mxu0 0.0
      %626 = vmatprep.subr.mxu0 0.0
      %627 = vmatpush1.msra.mxu0 0.0
      %628 = vmatprep.subr.mxu0 0.0
      %629 = vmatpush1.msra.mxu0 0.0
      %630 = vmatprep.subr.mxu0 0.0
      %631 = vmatpush1.msra.mxu0 0.0
      %632 = vmatprep.subr.mxu0 0.0
      %633 = vmatpush1.msra.mxu0 0.0
      %634 = vmatprep.subr.mxu0 0.0
      %635 = vmatpush1.msra.mxu0 0.0
      %636 = vmatprep.subr.mxu0 0.0
      %637 = vmatpush1.msra.mxu0 0.0
      %638 = vmatprep.subr.mxu0 0.0
      %639 = vmatpush1.msra.mxu0 0.0
      %640 = vmatprep.subr.mxu0 0.0
      %641 = vmatpush1.msra.mxu0 0.0
      %642 = vmatprep.mubr.f32.mxu0 0.0
      %643 = vmatmul.mubr.f32.gmra.mrb[0].mxu0 %v531
      %v644 = vpop.f32.mrb[0].mxu0
      %v645 = vadd.f32 %v271, %v644
      %v646 = vpop.f32.mrb[0].mxu0
      %647 = vmatprep.mubr.f32.mxu0 0.0
      %648 = vmatmul.mubr.f32.gmra.mrb[0].mxu0 %v534
      %v649 = vpop.f32.mrb[0].mxu0
      %v650 = vadd.f32 %v271, %v649
      %v651 = vpop.f32.mrb[0].mxu0
      %652 = vmatprep.mubr.f32.mxu0 0.0
      %653 = vmatmul.mubr.f32.gmra.mrb[0].mxu0 %v537
      %v654 = vpop.f32.mrb[0].mxu0
      %v655 = vadd.f32 %v271, %v654
      %v656 = vpop.f32.mrb[0].mxu0
      %657 = vmatprep.mubr.f32.mxu0 0.0
      %658 = vmatmul.mubr.f32.gmra.mrb[0].mxu0 %v540
      %v659 = vpop.f32.mrb[0].mxu0
      %v660 = vadd.f32 %v271, %v659
      %v661 = vpop.f32.mrb[0].mxu0
      %662 = vmatprep.mubr.f32.mxu0 0.0
      %663 = vmatmul.mubr.f32.gmra.mrb[0].mxu0 %v543
      %v664 = vpop.f32.mrb[0].mxu0
      %v665 = vadd.f32 %v271, %v664
      %v666 = vpop.f32.mrb[0].mxu0
      %667 = vmatprep.mubr.f32.mxu0 0.0
      %668 = vmatmul.mubr.f32.gmra.mrb[0].mxu0 %v546
      %v669 = vpop.f32.mrb[0].mxu0
      %v670 = vadd.f32 %v271, %v669
      %v671 = vpop.f32.mrb[0].mxu0
      %672 = vmatprep.mubr.f32.mxu0 0.0
      %673 = vmatmul.mubr.f32.gmra.mrb[0].mxu0 %v549
      %v674 = vpop.f32.mrb[0].mxu0
      %v675 = vadd.f32 %v271, %v674
      %v676 = vpop.f32.mrb[0].mxu0
      %677 = vmatprep.mubr.f32.mxu0 0.0
      %678 = vmatmul.mubr.f32.gmra.mrb[0].mxu0 %v552
      %v679 = vpop.f32.mrb[0].mxu0
      %v680 = vadd.f32 %v271, %v679
      %v681 = vpop.f32.mrb[0].mxu0
      %682 = vmatprep.mubr.f32.mxu0 0.0
      %683 = vmatmul.mubr.f32.gmra.mrb[0].mxu0 %v555
      %v684 = vpop.f32.mrb[0].mxu0
      %v685 = vadd.f32 %v271, %v684
      %v686 = vpop.f32.mrb[0].mxu0
      %687 = vmatprep.mubr.f32.mxu0 0.0
      %688 = vmatmul.mubr.f32.gmra.mrb[0].mxu0 %v558
      %v689 = vpop.f32.mrb[0].mxu0
      %v690 = vadd.f32 %v271, %v689
      %v691 = vpop.f32.mrb[0].mxu0
      %692 = vmatprep.mubr.f32.mxu0 0.0
      %693 = vmatmul.mubr.f32.gmra.mrb[0].mxu0 %v561
      %v694 = vpop.f32.mrb[0].mxu0
      %v695 = vadd.f32 %v271, %v694
      %v696 = vpop.f32.mrb[0].mxu0
      %697 = vmatprep.mubr.f32.mxu0 0.0
      %698 = vmatmul.mubr.f32.gmra.mrb[0].mxu0 %v564
      %v699 = vpop.f32.mrb[0].mxu0
      %v700 = vadd.f32 %v271, %v699
      %v701 = vpop.f32.mrb[0].mxu0
      %702 = vmatprep.mubr.f32.mxu0 0.0
      %703 = vmatmul.mubr.f32.gmra.mrb[0].mxu0 %v567
      %v704 = vpop.f32.mrb[0].mxu0
      %v705 = vadd.f32 %v271, %v704
      %v706 = vpop.f32.mrb[0].mxu0
      %707 = vmatprep.mubr.f32.mxu0 0.0
      %708 = vmatmul.mubr.f32.gmra.mrb[0].mxu0 %v570
      %v709 = vpop.f32.mrb[0].mxu0
      %v710 = vadd.f32 %v271, %v709
      %v711 = vpop.f32.mrb[0].mxu0
      %712 = vmatprep.mubr.f32.mxu0 0.0
      %713 = vmatmul.mubr.f32.gmra.mrb[0].mxu0 %v573
      %v714 = vpop.f32.mrb[0].mxu0
      %v715 = vadd.f32 %v271, %v714
      %v716 = vpop.f32.mrb[0].mxu0
      %717 = vmatprep.mubr.f32.mxu0 0.0
      %718 = vmatmul.mubr.f32.gmra.mrb[0].mxu0 %v576
      %v719 = vpop.f32.mrb[0].mxu0
      %v720 = vadd.f32 %v271, %v719
      %v721 = vpop.f32.mrb[0].mxu0
      %722 = vdwg.mxu0
      %v723 = vmul.f32 %v420, 2.0
      %v724 = vmul.f32 %v425, 2.0
      %v725 = vmul.f32 %v430, 2.0
      %v726 = vmul.f32 %v435, 2.0
      %v727 = vmul.f32 %v440, 2.0
      %v728 = vmul.f32 %v445, 2.0
      %v729 = vmul.f32 %v450, 2.0
      %v730 = vmul.f32 %v455, 2.0
      %v731 = vmul.f32 %v460, 2.0
      %v732 = vmul.f32 %v465, 2.0
      %v733 = vmul.f32 %v470, 2.0
      %v734 = vmul.f32 %v475, 2.0
      %v735 = vmul.f32 %v480, 2.0
      %v736 = vmul.f32 %v485, 2.0
      %v737 = vmul.f32 %v490, 2.0
      %v738 = vmul.f32 %v495, 2.0
      %v739 = vsub.f32 %v645, %v723
      %v740 = vsub.f32 %v650, %v724
      %v741 = vsub.f32 %v655, %v725
      %v742 = vsub.f32 %v660, %v726
      %v743 = vsub.f32 %v665, %v727
      %v744 = vsub.f32 %v670, %v728
      %v745 = vsub.f32 %v675, %v729
      %v746 = vsub.f32 %v680, %v730
      %v747 = vsub.f32 %v685, %v731
      %v748 = vsub.f32 %v690, %v732
      %v749 = vsub.f32 %v695, %v733
      %v750 = vsub.f32 %v700, %v734
      %v751 = vsub.f32 %v705, %v735
      %v752 = vsub.f32 %v710, %v736
      %v753 = vsub.f32 %v715, %v737
      %v754 = vsub.f32 %v720, %v738
      %v755 = vmax.f32 %v739, 0.0
      %v756 = vmax.f32 %v740, 0.0
      %v757 = vmax.f32 %v741, 0.0
      %v758 = vmax.f32 %v742, 0.0
      %v759 = vmax.f32 %v743, 0.0
      %v760 = vmax.f32 %v744, 0.0
      %v761 = vmax.f32 %v745, 0.0
      %v762 = vmax.f32 %v746, 0.0
      %v763 = vmax.f32 %v747, 0.0
      %v764 = vmax.f32 %v748, 0.0
      %v765 = vmax.f32 %v749, 0.0
      %v766 = vmax.f32 %v750, 0.0
      %v767 = vmax.f32 %v751, 0.0
      %v768 = vmax.f32 %v752, 0.0
      %v769 = vmax.f32 %v753, 0.0
      %v770 = vmax.f32 %v754, 0.0
      %v771 = vmin.f32 %v239, %v755
      %v772 = vmin.f32 %v240, %v756
      %v773 = vmin.f32 %v241, %v757
      %v774 = vmin.f32 %v242, %v758
      %v775 = vmin.f32 %v243, %v759
      %v776 = vmin.f32 %v244, %v760
      %v777 = vmin.f32 %v245, %v761
      %v778 = vmin.f32 %v246, %v762
      %v779 = vmin.f32 %v247, %v763
      %v780 = vmin.f32 %v248, %v764
      %v781 = vmin.f32 %v249, %v765
      %v782 = vmin.f32 %v250, %v766
      %v783 = vmin.f32 %v251, %v767
      %v784 = vmin.f32 %v252, %v768
      %v785 = vmin.f32 %v253, %v769
      %v786 = vmin.f32 %v254, %v770
      %v787 = vmin.f32 %v755, %v756
      %v788 = vmin.f32 %v757, %v758
      %v789 = vmin.f32 %v759, %v760
      %v790 = vmin.f32 %v761, %v762
      %v791 = vmin.f32 %v763, %v764
      %v792 = vmin.f32 %v765, %v766
      %v793 = vmin.f32 %v767, %v768
      %v794 = vmin.f32 %v769, %v770
      %v795 = vmin.f32 %v787, %v788
      %v796 = vmin.f32 %v789, %v790
      %v797 = vmin.f32 %v791, %v792
      %v798 = vmin.f32 %v793, %v794
      %v799 = vmin.f32 %v795, %v796
      %v800 = vmin.f32 %v797, %v798
      %v801 = vmin.f32 %v799, %v800
      %s802 = smul.u32 %s20, 128
      %s803 = sshra.s32 %s802, 7
      %s804 = sand.u32 %s802, 127
      %s805 = scalar_lea.vmem [#allocation3], %s803
      %v806 = vld [vmem:[%s805] sm:$0xff]
      %v807 = vmin.f32 %v806, %v801
      %808 = vst [vmem:[%s805] sm:$0xff] %v807
      %809 = vst [vmem:[#allocation2] sm:$0xff] %v771
      %810 = vst [vmem:[#allocation2 + $0x8] sm:$0xff] %v772
      %811 = vst [vmem:[#allocation2 + $0x10] sm:$0xff] %v773
      %812 = vst [vmem:[#allocation2 + $0x18] sm:$0xff] %v774
      %813 = vst [vmem:[#allocation2 + $0x20] sm:$0xff] %v775
      %814 = vst [vmem:[#allocation2 + $0x28] sm:$0xff] %v776
      %815 = vst [vmem:[#allocation2 + $0x30] sm:$0xff] %v777
      %816 = vst [vmem:[#allocation2 + $0x38] sm:$0xff] %v778
      %817 = vst [vmem:[#allocation2 + $0x40] sm:$0xff] %v779
      %818 = vst [vmem:[#allocation2 + $0x48] sm:$0xff] %v780
      %819 = vst [vmem:[#allocation2 + $0x50] sm:$0xff] %v781
      %820 = vst [vmem:[#allocation2 + $0x58] sm:$0xff] %v782
      %821 = vst [vmem:[#allocation2 + $0x60] sm:$0xff] %v783
      %822 = vst [vmem:[#allocation2 + $0x68] sm:$0xff] %v784
      %823 = vst [vmem:[#allocation2 + $0x70] sm:$0xff] %v785
      %824 = vst [vmem:[#allocation2 + $0x78] sm:$0xff] %v786
      // Predicated region
      $region37: #{hausdorff_loss.1} parent=27 // pred_check
        %p825 = pneg %p204
      $region38: #{hausdorff_loss.1} parent=27 // pred_check_branch
        %827 = sbr.rel (%p825) target = $region40
      $region39: #{hausdorff_loss.1} parent=27 // pred_region
        %828 = vmin.xlane.f32.xlu0 %v771
        %v829 = vpop.xlane.xlu0 %828
        %830 = vmin.xlane.f32.xlu0 %v772
        %v831 = vpop.xlane.xlu0 %830
        %832 = vmin.xlane.f32.xlu0 %v773
        %v833 = vpop.xlane.xlu0 %832
        %834 = vmin.xlane.f32.xlu0 %v774
        %v835 = vpop.xlane.xlu0 %834
        %836 = vmin.xlane.f32.xlu0 %v775
        %v837 = vpop.xlane.xlu0 %836
        %838 = vmin.xlane.f32.xlu0 %v776
        %v839 = vpop.xlane.xlu0 %838
        %840 = vmin.xlane.f32.xlu0 %v777
        %v841 = vpop.xlane.xlu0 %840
        %842 = vmin.xlane.f32.xlu0 %v778
        %v843 = vpop.xlane.xlu0 %842
        %844 = vmin.xlane.f32.xlu0 %v779
        %v845 = vpop.xlane.xlu0 %844
        %846 = vmin.xlane.f32.xlu0 %v780
        %v847 = vpop.xlane.xlu0 %846
        %848 = vmin.xlane.f32.xlu0 %v781
        %v849 = vpop.xlane.xlu0 %848
        %850 = vmin.xlane.f32.xlu0 %v782
        %v851 = vpop.xlane.xlu0 %850
        %852 = vmin.xlane.f32.xlu0 %v783
        %v853 = vpop.xlane.xlu0 %852
        %854 = vmin.xlane.f32.xlu0 %v784
        %v855 = vpop.xlane.xlu0 %854
        %856 = vmin.xlane.f32.xlu0 %v785
        %v857 = vpop.xlane.xlu0 %856
        %858 = vmin.xlane.f32.xlu0 %v786
        %v859 = vpop.xlane.xlu0 %858
        %v860 = vmax.f32 %v829, %v837
        %v861 = vmax.f32 %v831, %v839
        %v862 = vmax.f32 %v833, %v841
        %v863 = vmax.f32 %v835, %v843
        %v864 = vmax.f32 %v860, %v845
        %v865 = vmax.f32 %v861, %v847
        %v866 = vmax.f32 %v862, %v849
        %v867 = vmax.f32 %v863, %v851
        %v868 = vmax.f32 %v864, %v853
        %v869 = vmax.f32 %v865, %v855
        %v870 = vmax.f32 %v866, %v857
        %v871 = vmax.f32 %v867, %v859
        %v872 = vmax.f32 %v868, %v869
        %v873 = vmax.f32 %v870, %v871
        %v874 = vmax.f32 %v872, %v873
        %v875 = vrot.slane %v874, 4
        %v876 = vmax.f32 %v874, %v875
        %v877 = vrot.slane %v876, 2
        %v878 = vmax.f32 %v876, %v877
        %v879 = vrot.slane %v878, 1
        %v880 = vmax.f32 %v878, %v879
        %s881 = vtos %v880
        %s882 = sld [smem:[#allocation4]]
        %s883 = smax.f32 %s882, %s881
        %s884 = scalar_lea.smem [#allocation4], 0
        %885 = sst [smem:[%s884]] %s883
      $region40: #{hausdorff_loss.1} parent=27 // pred_fallthru
        _
      // Predicated region
      $region41: #{hausdorff_loss.1} parent=27 // pred_check
        _
      $region42: #{hausdorff_loss.1} parent=27 // pred_check_branch
        %887 = sbr.rel (%p205) target = $region44
      $region43: #{hausdorff_loss.1} parent=27 // pred_region
        %v888 = vld [vmem:[#allocation3] sm:$0xff]
        %v889 = vrot.slane %v888, 4
        %v890 = vmin.f32 %v888, %v889
        %v891 = vrot.slane %v890, 2
        %v892 = vmin.f32 %v890, %v891
        %v893 = vrot.slane %v892, 1
        %v894 = vmin.f32 %v892, %v893
        %895 = vmax.xlane.f32.xlu0 %v894
        %v896 = vpop.xlane.xlu0 %895
        %s897 = vtos %v896
        %s898 = sld [smem:[#allocation4]]
        %s899 = smax.f32 %s898, %s897
        %v900 = vstv %s899
        %v901 = vrsqrt.pop %v900
        %v902 = vmul.f32 %v900, %v901
        %vm903 = vcmp.eq.f32.partialorder %v900, inf
        %v904 = vsel %vm903, %v900, %v902
        %vm905 = vcmp.eq.f32.partialorder %v900, 0.0
        %v906 = vand.u32 %v900, 2147483648
        %v907 = vsel %vm905, %v906, %v904
        %908 = vst [vmem:[%s202] sm:$0xff] %v907
      $region44: #{hausdorff_loss.1} parent=27 // pred_fallthru
        _
      %p909 = scmp.lt.s32.totalorder %s18, 1
      %s910 = scalar_select %p909, %s18, 1
      %s911 = smul.addr %s910, 8
      %s912 = scalar_lea.vmem %s2, %s911
      // Predicated region
      $region45: #{hausdorff_loss.1} parent=27 // pred_check
        %p913 = pneg %p106
      $region46: #{hausdorff_loss.1} parent=27 // pred_check_branch
        %915 = sbr.rel (%p913) target = $region48
      $region47: #{hausdorff_loss.1} parent=27 // pred_region
        _
      $region48: #{hausdorff_loss.1} parent=27 // pred_fallthru
        _
    $region28: #{hausdorff_loss.1} parent=5 // pred_fallthru
      _
    %p916 = scmp.le.s32.totalorder 2, %s8
    // Predicated region
    $region49: #{hausdorff_loss.1} parent=5 // pred_check
      %p917 = pneg %p916
    $region50: #{hausdorff_loss.1} parent=5 // pred_check_branch
      %919 = sbr.rel (%p917) target = $region52
    $region51: #{hausdorff_loss.1} parent=5 // pred_region
      %s920 = ssub.s32 %s8, 2
      // Predicated region
      $region53: #{hausdorff_loss.1} parent=51 // pred_check
        %p921 = pneg %p112
      $region54: #{hausdorff_loss.1} parent=51 // pred_check_branch
        %923 = sbr.rel (%p921) target = $region56
      $region55: #{hausdorff_loss.1} parent=51 // pred_region
        %p924 = scmp.lt.s32.totalorder %s21, 1
        %s925 = scalar_select %p924, %s21, 1
        %s926 = smul.addr %s925, 8
        %s927 = scalar_lea.vmem %s2, %s926
      $region56: #{hausdorff_loss.1} parent=51 // pred_fallthru
        _
    $region52: #{hausdorff_loss.1} parent=5 // pred_fallthru
      _
  $region6: #{hausdorff_loss.1} parent=0 // loop_footer
    %s12 = sadd.s32 1, %s8
  $region7: #{hausdorff_loss.1} parent=0 // loop_footer_branch
    %7 = sbr.rel target = $region3
  $region8: #{hausdorff_loss.1} parent=0 // loop_exit
    _

</llo_original>
